<compile_context>
chip_gen: v6e
topology: v6e:2x2x1
jax: 0.10.0
libtpu: 0.0.40
codegen_flags: <defaults>
</compile_context>

<pallas_src>
import functools

import jax
import jax.numpy as jnp
from jax import lax
from jax.experimental import pallas as pl
from jax.experimental.pallas import tpu as pltpu

CLAMP_MIN = 1e-12
CLAMP_MAX = 1e12


def _center_loss_kernel(x_ref,        # VMEM (TB, D)  float  (current batch tile)
                        labels_ref,   # VMEM (TB, 1)  int32  (labels for this tile)
                        centers_ref,  # VMEM (C,  D)  float  (resident across the grid)
                        out_ref,      # VMEM (1,  1)  f32    (per-core resident accumulator)
                        *, actual_batch, block_rows, tiles_per_core, num_classes):
    core = pl.program_id(0)
    step = pl.program_id(1)

    # Init the per-core resident accumulator on this core's first tile.
    @pl.when(step == 0)
    def _():
        out_ref[...] = jnp.zeros_like(out_ref)

    x = x_ref[...].astype(jnp.float32)               # (TB, D)
    centers = centers_ref[...].astype(jnp.float32)   # (C, D)
    lbl = labels_ref[...]                            # (TB, 1) int32

    # ---- gather centers[labels] via a one-hot matmul on the otherwise-idle MXU ----
    class_ids = lax.broadcasted_iota(jnp.int32, (block_rows, num_classes), 1)
    onehot = (lbl == class_ids).astype(jnp.float32)                     # (TB, C)
    cg = jnp.dot(onehot, centers, preferred_element_type=jnp.float32)   # (TB, D)

    # ---- fused per-row squared distance (single cross-lane reduction) + clamp ----
    diff = x - cg
    d = jnp.clip(jnp.sum(diff * diff, axis=-1, keepdims=True), CLAMP_MIN, CLAMP_MAX)

    # ---- mask rows that only exist because of batch padding ----
    row0 = (core * tiles_per_core + step) * block_rows
    row_ids = row0 + lax.broadcasted_iota(jnp.int32, (block_rows, 1), 0)
    d = jnp.where(row_ids < actual_batch, d, 0.0)

    out_ref[...] += jnp.sum(d, axis=0, keepdims=True)                   # (1, 1)


def _vmem_need_bytes(tb, C, D):
    x_tiles = 2 * tb * D * 4       # double-buffered streamed x tile
    lbl_tiles = 2 * tb * 1 * 4     # double-buffered labels tile
    centers = 2 * C * D * 4        # resident centers (counted x2, conservatively)
    onehot = tb * C * 4            # in-kernel one-hot intermediate
    work = 2 * tb * D * 4          # gathered-centers / diff intermediates
    return x_tiles + lbl_tiles + centers + onehot + work + (1 << 12)


def _pick_block_rows(B, C, D, budget_bytes):
    """Largest tile (multiple of 8, <= padded batch) whose footprint fits the budget."""
    cap = max(8, ((B + 7) // 8) * 8)
    for tb in (1024, 512, 256, 128, 64, 32, 16, 8):
        if tb > cap:
            continue
        if _vmem_need_bytes(tb, C, D) <= budget_bytes:
            return tb
    return 8


def center_loss(x, centers, labels, *, block_rows=None, num_cores=2):
    """x: (B, D), centers: (C, D), labels: (B,) int -> scalar f32 loss.

    x / centers may be f32 or bf16 (computation is done in f32 inside the kernel).
    """
    B, D = x.shape
    C, D2 = centers.shape
    assert D == D2, "feature dims must match"

    # TODO(synk): fall back to a double-buffered HBM row-gather path when the resident
    # centers table (C*D*4 bytes) does not fit the VMEM budget.
    if block_rows is None:
        block_rows = _pick_block_rows(B, C, D, budget_bytes=24 * 1024 * 1024)
    assert block_rows % 8 == 0, "block_rows must be a multiple of 8"

    labels = labels.astype(jnp.int32).reshape(B, 1)

    tiles = max(1, -(-B // block_rows))
    tiles = -(-tiles // num_cores) * num_cores        # whole number of tiles per core
    tiles_per_core = tiles // num_cores
    b_pad = tiles * block_rows

    if b_pad != B:
        x = jnp.pad(x, ((0, b_pad - B), (0, 0)))
        labels = jnp.pad(labels, ((0, b_pad - B), (0, 0)))

    need = _vmem_need_bytes(block_rows, C, D)
    vmem_limit = int(min(48 * 1024 * 1024, max(need + (2 << 20), 16 * 1024 * 1024)))

    kernel = functools.partial(
        _center_loss_kernel,
        actual_batch=B,
        block_rows=block_rows,
        tiles_per_core=tiles_per_core,
        num_classes=C,
    )

    partials = pl.pallas_call(
        kernel,
        out_shape=jax.ShapeDtypeStruct((num_cores, 1, 1), jnp.float32),
        grid_spec=pltpu.PrefetchScalarGridSpec(
            num_scalar_prefetch=0,
            grid=(num_cores, tiles_per_core),
            in_specs=[
                pl.BlockSpec((block_rows, D), lambda c, i: (c * tiles_per_core + i, 0)),
                pl.BlockSpec((block_rows, 1), lambda c, i: (c * tiles_per_core + i, 0)),
                pl.BlockSpec((C, D), lambda c, i: (0, 0)),   # centers: resident in VMEM
            ],
            out_specs=pl.BlockSpec((None, 1, 1), lambda c, i: (c, 0, 0)),
        ),
        compiler_params=pltpu.CompilerParams(
            dimension_semantics=("parallel", "arbitrary"),
            vmem_limit_bytes=vmem_limit,
        ),
    )(x, labels, centers)

    total = jnp.sum(partials)
    comp = jnp.float32(B * (C - 1) * CLAMP_MIN)   # masked zeros lifted by the clamp
    return (total + comp) / jnp.float32(B)


def center_loss_ref(x, centers, labels):
    """Pure-JAX reference mirroring the PyTorch forward exactly."""
    B = x.shape[0]
    C = centers.shape[0]
    distmat = (
        jnp.sum(x * x, axis=1, keepdims=True)
        + jnp.sum(centers * centers, axis=1, keepdims=True).T
        - 2.0 * x @ centers.T
    )
    mask = (labels[:, None] == jnp.arange(C)[None, :]).astype(jnp.float32)
    dist = jnp.clip(distmat * mask, CLAMP_MIN, CLAMP_MAX)
    return jnp.sum(dist) / B


if __name__ == "__main__":
    # Small, deterministic setup consistent with CenterLoss(num_classes=10, feat_dim=8)
    num_classes = 10
    feat_dim = 8
    batch_size = 16

    key = jax.random.PRNGKey(0)
    k_centers, k_x, k_labels = jax.random.split(key, 3)

    centers = jax.random.normal(k_centers, (num_classes, feat_dim), dtype=jnp.float32)
    x = jax.random.normal(k_x, (batch_size, feat_dim), dtype=jnp.float32)
    labels = jax.random.randint(k_labels, (batch_size,), 0, num_classes, dtype=jnp.int32)

    loss_ref = jax.block_until_ready(center_loss_ref(x, centers, labels))

    # block_rows=8 -> 2 tiles split across the 2-wide parallel axis (multi-tile path).
    loss = jax.block_until_ready(center_loss(x, centers, labels, block_rows=8))
    assert jnp.allclose(loss, loss_ref, rtol=1e-5, atol=1e-5), (loss, loss_ref)

    # Auto tile selection (exercises the batch-padding + in-kernel row-masking path).
    loss_auto = jax.block_until_ready(center_loss(x, centers, labels))
    assert jnp.allclose(loss_auto, loss_ref, rtol=1e-5, atol=1e-5), (loss_auto, loss_ref)

    print("KERNEL_OK")
</pallas_src>

<mosaic_0001>
module attributes {stable_mosaic.version = 11 : i64} {
  func.func @_center_loss_kernel(%arg0: i32, %arg1: i32, %arg2: memref<8x8xf32, #tpu.memory_space<vmem>>, %arg3: memref<8x1xi32, #tpu.memory_space<vmem>>, %arg4: memref<10x8xf32, #tpu.memory_space<vmem>>, %arg5: memref<1x1x1xf32, #tpu.memory_space<vmem>>) attributes {dimension_semantics = [#tpu.dimension_semantics<parallel>, #tpu.dimension_semantics<arbitrary>], iteration_bounds = array<i64: 2, 1>, scalar_prefetch = 0 : i64, scratch_operands = 0 : i64, tpu.core_type = #tpu.core_type<tc>, window_params = [{transform_indices = @transform_0, window_bounds = array<i64: 8, 8>}, {transform_indices = @transform_1, window_bounds = array<i64: 8, 1>}, {pipeline_mode = #tpu.pipeline_mode<synchronous>, transform_indices = @transform_2, window_bounds = array<i64: 10, 8>}, {transform_indices = @transform_3, window_bounds = array<i64: 1, 1, 1>}]} {
    %c0_i32 = arith.constant 0 : i32
    %0 = arith.cmpi eq, %arg1, %c0_i32 : i32
    %1 = arith.extui %0 : i1 to i32
    %c0_i32_0 = arith.constant 0 : i32
    %2 = arith.cmpi ne, %1, %c0_i32_0 : i32
    scf.if %2 {
      %cst_17 = arith.constant 0.000000e+00 : f32
      %38 = vector.broadcast %cst_17 : f32 to vector<1x1xf32>
      %c0_18 = arith.constant 0 : index
      %c0_19 = arith.constant 0 : index
      %c0_20 = arith.constant 0 : index
      %39 = vector.load %arg5[%c0_18, %c0_19, %c0_20] : memref<1x1x1xf32, #tpu.memory_space<vmem>>, vector<1x1x1xf32>
      %40 = vector.shape_cast %39 : vector<1x1x1xf32> to vector<1x1xf32>
      %41 = vector.shape_cast %38 : vector<1x1xf32> to vector<1x1x1xf32>
      tpu.vector_store %arg5[%c0_18, %c0_19, %c0_20], %41 {strides = array<i32>} : memref<1x1x1xf32, #tpu.memory_space<vmem>>, vector<1x1x1xf32>,
    } else {
    }
    %c0 = arith.constant 0 : index
    %c0_1 = arith.constant 0 : index
    %3 = vector.load %arg2[%c0, %c0_1] : memref<8x8xf32, #tpu.memory_space<vmem>>, vector<8x8xf32>
    %c0_2 = arith.constant 0 : index
    %c0_3 = arith.constant 0 : index
    %4 = vector.load %arg4[%c0_2, %c0_3] : memref<10x8xf32, #tpu.memory_space<vmem>>, vector<10x8xf32>
    %c0_4 = arith.constant 0 : index
    %c0_5 = arith.constant 0 : index
    %5 = vector.load %arg3[%c0_4, %c0_5] : memref<8x1xi32, #tpu.memory_space<vmem>>, vector<8x1xi32>
    %6 = tpu.iota {dimensions = array<i32: 1>} : vector<8x10xi32>
    %7 = vector.broadcast %5 : vector<8x1xi32> to vector<8x10xi32>
    %8 = arith.cmpi eq, %7, %6 : vector<8x10xi32>
    %9 = arith.extui %8 : vector<8x10xi1> to vector<8x10xi32>
    %10 = arith.sitofp %9 : vector<8x10xi32> to vector<8x10xf32>
    %cst = arith.constant dense<0.000000e+00> : vector<8x8xf32>
    %11 = tpu.matmul %10, %4, %cst {dimension_numbers = #tpu.dot_dimension_numbers<[1], [0], [0], [1], [0, 0, 1, 1], [], []>} : vector<8x10xf32>, vector<10x8xf32>, vector<8x8xf32> -> vector<8x8xf32>
    %12 = arith.subf %3, %11 : vector<8x8xf32>
    %13 = arith.mulf %12, %12 : vector<8x8xf32>
    %cst_6 = arith.constant dense<0.000000e+00> : vector<8xf32>
    %14 = vector.multi_reduction <add>, %13, %cst_6 [1] : vector<8x8xf32> to vector<8xf32>
    %15 = vector.shape_cast %14 : vector<8xf32> to vector<8x1xf32>
    %cst_7 = arith.constant 9.99999996E-13 : f32
    %cst_8 = arith.constant 9.99999995E+11 : f32
    %16 = vector.broadcast %cst_7 : f32 to vector<8x1xf32>
    %17 = arith.maximumf %16, %15 : vector<8x1xf32>
    %18 = vector.broadcast %cst_8 : f32 to vector<8x1xf32>
    %19 = arith.minimumf %18, %17 : vector<8x1xf32>
    %c1_i32 = arith.constant 1 : i32
    %20 = arith.muli %arg0, %c1_i32 : i32
    %21 = arith.addi %20, %arg1 : i32
    %c8_i32 = arith.constant 8 : i32
    %22 = arith.muli %21, %c8_i32 : i32
    %23 = tpu.iota {dimensions = array<i32: 0>} : vector<8x1xi32>
    %24 = vector.broadcast %22 : i32 to vector<8x1xi32>
    %25 = arith.addi %24, %23 : vector<8x1xi32>
    %c16_i32 = arith.constant 16 : i32
    %26 = vector.broadcast %c16_i32 : i32 to vector<8x1xi32>
    %27 = arith.cmpi slt, %25, %26 : vector<8x1xi32>
    %cst_9 = arith.constant 0.000000e+00 : f32
    %28 = vector.broadcast %cst_9 : f32 to vector<8x1xf32>
    %29 = arith.select %27, %19, %28 : vector<8x1xi1>, vector<8x1xf32>
    %c0_10 = arith.constant 0 : index
    %c0_11 = arith.constant 0 : index
    %c0_12 = arith.constant 0 : index
    %30 = vector.load %arg5[%c0_10, %c0_11, %c0_12] : memref<1x1x1xf32, #tpu.memory_space<vmem>>, vector<1x1x1xf32>
    %31 = vector.shape_cast %30 : vector<1x1x1xf32> to vector<1x1xf32>
    %cst_13 = arith.constant dense<0.000000e+00> : vector<1xf32>
    %32 = vector.multi_reduction <add>, %29, %cst_13 [0] : vector<8x1xf32> to vector<1xf32>
    %33 = vector.shape_cast %32 : vector<1xf32> to vector<1x1xf32>
    %34 = arith.addf %31, %33 : vector<1x1xf32>
    %c0_14 = arith.constant 0 : index
    %c0_15 = arith.constant 0 : index
    %c0_16 = arith.constant 0 : index
    %35 = vector.load %arg5[%c0_14, %c0_15, %c0_16] : memref<1x1x1xf32, #tpu.memory_space<vmem>>, vector<1x1x1xf32>
    %36 = vector.shape_cast %35 : vector<1x1x1xf32> to vector<1x1xf32>
    %37 = vector.shape_cast %34 : vector<1x1xf32> to vector<1x1x1xf32>
    tpu.vector_store %arg5[%c0_14, %c0_15, %c0_16], %37 {strides = array<i32>} : memref<1x1x1xf32, #tpu.memory_space<vmem>>, vector<1x1x1xf32>,
    return
  }
  func.func @transform_0(%arg0: i32, %arg1: i32) -> (i32, i32) {
    %c1_i32 = arith.constant 1 : i32
    %0 = arith.muli %arg0, %c1_i32 : i32
    %1 = arith.addi %0, %arg1 : i32
    %c0_i32 = arith.constant 0 : i32
    %c0_i32_0 = arith.constant 0 : i32
    return %1, %c0_i32 : i32, i32
  }
  func.func @transform_1(%arg0: i32, %arg1: i32) -> (i32, i32) {
    %c1_i32 = arith.constant 1 : i32
    %0 = arith.muli %arg0, %c1_i32 : i32
    %1 = arith.addi %0, %arg1 : i32
    %c0_i32 = arith.constant 0 : i32
    %c0_i32_0 = arith.constant 0 : i32
    return %1, %c0_i32 : i32, i32
  }
  func.func @transform_2(%arg0: i32, %arg1: i32) -> (i32, i32) {
    %c0_i32 = arith.constant 0 : i32
    %c0_i32_0 = arith.constant 0 : i32
    %c0_i32_1 = arith.constant 0 : i32
    return %c0_i32, %c0_i32_0 : i32, i32
  }
  func.func @transform_3(%arg0: i32, %arg1: i32) -> (i32, i32, i32) {
    %c0_i32 = arith.constant 0 : i32
    %c0_i32_0 = arith.constant 0 : i32
    %c0_i32_1 = arith.constant 0 : i32
    return %arg0, %c0_i32, %c0_i32_0 : i32, i32, i32
  }
}

</mosaic_0001>

<llo_original>
// kernel: tpu_custom_call.1
$region0: #{tpu_custom_call.1}
  #allocation0 [shape = 'u32[]', space=smem, size = 0x4, offset = 0x4, fixed_abs, tag = 'smem constant byte address 0x4 - core index']
  #allocation1 [shape = 'u32[144,128]{1,0:T(1,128)}', space=vmem, size = 0x12000, scoped, tag = 'internal scratch']
  %s0 = inlined_call_operand.vmem [shape: f32[16,8], index: 0, kind: input, shape index: {}]
  %s1 = inlined_call_operand.vmem [shape: s32[16,1], index: 1, kind: input, shape index: {}]
  %s2 = inlined_call_operand.vmem [shape: f32[10,8], index: 2, kind: input, shape index: {}]
  %s3 = inlined_call_operand.vmem [shape: f32[2,1,1], index: 3, kind: output, shape index: {}]
  %s4 = sld [smem:[#allocation0]]
  $region49: #{tpu_custom_call.1} parent=0
    _
  %s6 = ssub.s32 1, %s4
  %s7 = scalar_select 0, %s6, %s4
  loop: start=0, step=1, limit=4
  $region2: #{tpu_custom_call.1} parent=0 // loop_pre_header
    _
  $region3: #{tpu_custom_call.1} parent=0 // loop_header
    %s9 = sphi 0, %s13
    %p10 = scmp.ge.s32.totalorder %s9, 4
    %s16 = sphi 0, %s28
    %s17 = sphi 0, %s24
    %s18 = sphi 0, %s16
    %s19 = sphi 0, %s17
    %s20 = sphi 0, %s18
    %s21 = sphi 0, %s19
    %s33 = sphi 0, %s35
    %s36 = sphi 0, %s33
    %s37 = sphi 0, %s36
    %s53 = sphi 0, %s37
    %s61 = sphi 0, %s63
    %s64 = sphi 0, %s61
    %s65 = sphi 0, %s64
    %s81 = sphi 0, %s65
    %s85 = sphi 0, %s85
    %s87 = sphi 0, %s85
    %s88 = sphi 0, %s87
    %s102 = sphi 0, %s88
    %s108 = sphi 0, %s110
    %s111 = sphi 0, %s108
    %s112 = sphi 0, %s111
    %s128 = sphi 0, %s112
  $region4: #{tpu_custom_call.1} parent=0 // loop_header_branch
    %12 = sbr.rel (%p10) target = $region8
  $region5: #{tpu_custom_call.1} parent=0 // loop_body
    %s14 = ssub.s32 %s9, 1
    %s15 = ssub.s32 %s9, 2
    %s22 = sadd.s32 1, %s17
    %p23 = scmp.ge.s32.totalorder %s22, 1
    %s24 = scalar_select %p23, 0, %s22
    %s25 = sadd.s32 1, %s16
    %s26 = scalar_select %p23, %s25, %s16
    %p27 = scmp.ge.s32.totalorder %s26, 2
    %s28 = scalar_select %p27, 0, %s26
    %s29 = sadd.s32 %s16, %s17
    %s30 = sadd.s32 %s28, %s24
    %s31 = ssub.s32 %s29, %s30
    %p32 = scmp.eq.s32.totalorder %s31, 0
    %s34 = sadd.s32 %s33, 1
    %s35 = scalar_select %p32, %s33, %s34
    %p38 = pneg %p32
    %p39 = scmp.eq.s32.totalorder %s9, 1
    %p40 = por %p38, %p39
    %p41 = scmp.ne.s32.totalorder %s33, %s36
    %p42 = scmp.eq.s32.totalorder %s9, 0
    %p43 = por %p41, %p42
    %p44 = scmp.ne.s32.totalorder %s33, %s36
    %p45 = scmp.eq.s32.totalorder %s14, 1
    %p46 = por %p44, %p45
    %p47 = scmp.ne.s32.totalorder %s36, %s37
    %p48 = scmp.eq.s32.totalorder %s14, 0
    %p49 = por %p47, %p48
    %p50 = scmp.ne.s32.totalorder %s36, %s37
    %p51 = scmp.eq.s32.totalorder %s15, 1
    %p52 = por %p50, %p51
    %p54 = scmp.ne.s32.totalorder %s37, %s53
    %p55 = scmp.eq.s32.totalorder %s15, 0
    %p56 = por %p54, %p55
    %s57 = sadd.s32 %s16, %s17
    %s58 = sadd.s32 %s28, %s24
    %s59 = ssub.s32 %s57, %s58
    %p60 = scmp.eq.s32.totalorder %s59, 0
    %s62 = sadd.s32 %s61, 1
    %s63 = scalar_select %p60, %s61, %s62
    %p66 = pneg %p60
    %p67 = scmp.eq.s32.totalorder %s9, 1
    %p68 = por %p66, %p67
    %p69 = scmp.ne.s32.totalorder %s61, %s64
    %p70 = scmp.eq.s32.totalorder %s9, 0
    %p71 = por %p69, %p70
    %p72 = scmp.ne.s32.totalorder %s61, %s64
    %p73 = scmp.eq.s32.totalorder %s14, 1
    %p74 = por %p72, %p73
    %p75 = scmp.ne.s32.totalorder %s64, %s65
    %p76 = scmp.eq.s32.totalorder %s14, 0
    %p77 = por %p75, %p76
    %p78 = scmp.ne.s32.totalorder %s64, %s65
    %p79 = scmp.eq.s32.totalorder %s15, 1
    %p80 = por %p78, %p79
    %p82 = scmp.ne.s32.totalorder %s65, %s81
    %p83 = scmp.eq.s32.totalorder %s15, 0
    %p84 = por %p82, %p83
    %s86 = sadd.s32 %s85, 1
    %p89 = scmp.eq.s32.totalorder %s9, 1
    %p90 = scmp.ne.s32.totalorder %s85, %s87
    %p91 = scmp.eq.s32.totalorder %s9, 0
    %p92 = por %p90, %p91
    %p93 = scmp.ne.s32.totalorder %s85, %s87
    %p94 = scmp.eq.s32.totalorder %s14, 1
    %p95 = por %p93, %p94
    %p96 = scmp.ne.s32.totalorder %s87, %s88
    %p97 = scmp.eq.s32.totalorder %s14, 0
    %p98 = por %p96, %p97
    %p99 = scmp.ne.s32.totalorder %s87, %s88
    %p100 = scmp.eq.s32.totalorder %s15, 1
    %p101 = por %p99, %p100
    %p103 = scmp.ne.s32.totalorder %s88, %s102
    %p104 = scmp.eq.s32.totalorder %s15, 0
    %p105 = por %p103, %p104
    %s106 = ssub.s32 %s16, %s28
    %p107 = scmp.eq.s32.totalorder %s106, 0
    %s109 = sadd.s32 %s108, 1
    %s110 = scalar_select %p107, %s108, %s109
    %p113 = pneg %p107
    %p114 = scmp.eq.s32.totalorder %s9, 1
    %p115 = por %p113, %p114
    %p116 = scmp.ne.s32.totalorder %s108, %s111
    %p117 = scmp.eq.s32.totalorder %s9, 0
    %p118 = por %p116, %p117
    %p119 = scmp.ne.s32.totalorder %s108, %s111
    %p120 = scmp.eq.s32.totalorder %s14, 1
    %p121 = por %p119, %p120
    %p122 = scmp.ne.s32.totalorder %s111, %s112
    %p123 = scmp.eq.s32.totalorder %s14, 0
    %p124 = por %p122, %p123
    %p125 = scmp.ne.s32.totalorder %s111, %s112
    %p126 = scmp.eq.s32.totalorder %s15, 1
    %p127 = por %p125, %p126
    %p129 = scmp.ne.s32.totalorder %s112, %s128
    %p130 = scmp.eq.s32.totalorder %s15, 0
    %p131 = por %p129, %p130
    %p132 = scmp.le.s32.totalorder 1, %s9
    %p133 = scmp.lt.s32.totalorder %s9, 3
    %p134 = pnand %p132, %p133
    %p135 = pneg %p134
    // Predicated region
    $region9: #{tpu_custom_call.1} parent=5 // pred_check
      _
    $region10: #{tpu_custom_call.1} parent=5 // pred_check_branch
      %137 = sbr.rel (%p134) target = $region12
    $region11: #{tpu_custom_call.1} parent=5 // pred_region
      %s138 = ssub.s32 %s9, 1
      // Predicated region
      $region13: #{tpu_custom_call.1} parent=11 // pred_check
        %p139 = pneg %p98
      $region14: #{tpu_custom_call.1} parent=11 // pred_check_branch
        %141 = sbr.rel (%p139) target = $region16
      $region15: #{tpu_custom_call.1} parent=11 // pred_region
        _
      $region16: #{tpu_custom_call.1} parent=11 // pred_fallthru
        _
    $region12: #{tpu_custom_call.1} parent=5 // pred_fallthru
      _
    %p142 = scmp.lt.s32.totalorder %s9, 2
    // Predicated region
    $region17: #{tpu_custom_call.1} parent=5 // pred_check
      %p143 = pneg %p142
    $region18: #{tpu_custom_call.1} parent=5 // pred_check_branch
      %145 = sbr.rel (%p143) target = $region20
    $region19: #{tpu_custom_call.1} parent=5 // pred_region
      // Predicated region
      $region21: #{tpu_custom_call.1} parent=19 // pred_check
        %p146 = pneg %p43
      $region22: #{tpu_custom_call.1} parent=19 // pred_check_branch
        %148 = sbr.rel (%p146) target = $region24
      $region23: #{tpu_custom_call.1} parent=19 // pred_region
        %s149 = sadd.s32 %s16, %s17
        %p150 = scmp.lt.s32.totalorder %s149, 1
        %s151 = scalar_select %p150, %s149, 1
        %s152 = smul.addr %s151, 8
        %s153 = scalar_lea.vmem %s0, %s152
        %s154 = sadd.s32 %s16, %s17
      $region24: #{tpu_custom_call.1} parent=19 // pred_fallthru
        _
      // Predicated region
      $region25: #{tpu_custom_call.1} parent=19 // pred_check
        %p155 = pneg %p71
      $region26: #{tpu_custom_call.1} parent=19 // pred_check_branch
        %157 = sbr.rel (%p155) target = $region28
      $region27: #{tpu_custom_call.1} parent=19 // pred_region
        %s158 = sadd.s32 %s16, %s17
        %p159 = scmp.lt.s32.totalorder %s158, 1
        %s160 = scalar_select %p159, %s158, 1
        %s161 = smul.addr %s160, 8
        %s162 = scalar_lea.vmem %s1, %s161
        %s163 = sadd.s32 %s16, %s17
      $region28: #{tpu_custom_call.1} parent=19 // pred_fallthru
        _
    $region20: #{tpu_custom_call.1} parent=5 // pred_fallthru
      _
    %p164 = scmp.le.s32.totalorder 1, %s9
    %p165 = scmp.lt.s32.totalorder %s9, 3
    %p166 = pnand %p164, %p165
    %p167 = pneg %p166
    // Predicated region
    $region29: #{tpu_custom_call.1} parent=5 // pred_check
      _
    $region30: #{tpu_custom_call.1} parent=5 // pred_check_branch
      %169 = sbr.rel (%p166) target = $region32
    $region31: #{tpu_custom_call.1} parent=5 // pred_region
      %s170 = ssub.s32 %s9, 1
      %s171 = sadd.s32 %s18, %s19
      %p172 = scmp.lt.s32.totalorder %s171, 1
      %s173 = scalar_select %p172, %s171, 1
      %s174 = smul.addr %s173, 8
      %s175 = scalar_lea.vmem %s0, %s174
      %p176 = pneg %p49
      %p177 = pneg %p46
      %s178 = sadd.s32 %s18, %s19
      %p179 = scmp.lt.s32.totalorder %s178, 1
      %s180 = scalar_select %p179, %s178, 1
      %s181 = smul.addr %s180, 8
      %s182 = scalar_lea.vmem %s1, %s181
      %p183 = pneg %p77
      %p184 = pneg %p74
      %p185 = pneg %p98
      %p186 = pneg %p95
      %p187 = pneg %p124
      %p188 = pneg %p121
      %p189 = scmp.lt.s32.totalorder %s18, 1
      %s190 = scalar_select %p189, %s18, 1
      %s191 = scalar_lea.vmem %s3, %s190
      %s192 = sadd.s32 %s18, %s19
      %p193 = scmp.lt.s32.totalorder %s192, 1
      %s194 = scalar_select %p193, %s192, 1
      %s195 = smul.addr %s194, 8
      %s196 = scalar_lea.vmem %s0, %s195
      %s197 = sadd.s32 %s18, %s19
      %s198 = sadd.s32 %s18, %s19
      %p199 = scmp.lt.s32.totalorder %s198, 1
      %s200 = scalar_select %p199, %s198, 1
      %s201 = smul.addr %s200, 8
      %s202 = scalar_lea.vmem %s1, %s201
      %s203 = sadd.s32 %s18, %s19
      %p204 = scmp.lt.s32.totalorder %s18, 1
      %s205 = scalar_select %p204, %s18, 1
      %s206 = scalar_lea.vmem %s3, %s205
      %p207 = scmp.eq.s32.totalorder %s19, 0
      // Predicated region
      $region33: #{tpu_custom_call.1} parent=31 // pred_check
        %p208 = pneg %p207
      $region34: #{tpu_custom_call.1} parent=31 // pred_check_branch
        %210 = sbr.rel (%p208) target = $region36
      $region35: #{tpu_custom_call.1} parent=31 // pred_region
        %vm211 = vcmask 0
        %212 = vst.msk [vmem:[%s206] sm:$0x1] %vm211, 0.0
      $region36: #{tpu_custom_call.1} parent=31 // pred_fallthru
        _
      %v213 = vld [vmem:[%s196] sm:$0xff]
      %v214 = vld [vmem:[%s2] sm:$0xff]
      %v215 = vld [vmem:[%s2 + $0x8] sm:$0x3]
      %v216 = vld [vmem:[%s202] sm:$0xff]
      %v217 = vlaneseq
      %v218 = vand.u32 %v217, 127
      %219 = vset.pattern.permute.xlu0 0
      %220 = vperm.xlu0 %219, %v216
      %v221 = vpop.permute.xlu0 %220
      %vm222 = vcmp.eq.s32.totalorder %v221, %v218
      %v223 = vsel %vm222, 1, 0
      %v224 = vcvt.s32.f32 %v223
      %vm225 = vcmask 80896
      %v227 = vsel %vm225, %v224, 0
      %vm229 = vcmask 1041408
      %v231 = vsel %vm229, %v215, 0
      %233 = vmatprep.subr.mxu0 0.0
      %234 = vmatpush1.msra.mxu0 0.0
      %235 = vmatprep.subr.mxu0 0.0
      %236 = vmatpush1.msra.mxu0 0.0
      %237 = vmatprep.subr.mxu0 0.0
      %238 = vmatpush1.msra.mxu0 0.0
      %239 = vmatprep.subr.mxu0 0.0
      %240 = vmatpush1.msra.mxu0 0.0
      %241 = vmatprep.subr.mxu0 0.0
      %242 = vmatpush1.msra.mxu0 0.0
      %243 = vmatprep.subr.mxu0 0.0
      %244 = vmatpush1.msra.mxu0 0.0
      %245 = vmatprep.subr.mxu0 0.0
      %246 = vmatpush1.msra.mxu0 0.0
      %247 = vmatprep.subr.mxu0 0.0
      %248 = vmatpush1.msra.mxu0 0.0
      %249 = vmatprep.subr.mxu0 0.0
      %250 = vmatpush1.msra.mxu0 0.0
      %251 = vmatprep.subr.mxu0 0.0
      %252 = vmatpush1.msra.mxu0 0.0
      %253 = vmatprep.subr.mxu0 0.0
      %254 = vmatpush1.msra.mxu0 0.0
      %255 = vmatprep.subr.mxu0 0.0
      %256 = vmatpush1.msra.mxu0 0.0
      %257 = vmatprep.subr.mxu0 0.0
      %258 = vmatpush1.msra.mxu0 0.0
      %259 = vmatprep.subr.mxu0 0.0
      %260 = vmatpush1.msra.mxu0 0.0
      %261 = vmatprep.subr.mxu0 0.0
      %262 = vmatpush1.msra.mxu0 %v231
      %263 = vmatprep.subr.mxu0 0.0
      %264 = vmatpush1.msra.mxu0 %v214
      %265 = vmatprep.subr.mxu0 0.0
      %266 = vmatpush2.msra.mxu0 0.0
      %267 = vmatprep.subr.mxu0 0.0
      %268 = vmatpush2.msra.mxu0 0.0
      %269 = vmatprep.subr.mxu0 0.0
      %270 = vmatpush2.msra.mxu0 0.0
      %271 = vmatprep.subr.mxu0 0.0
      %272 = vmatpush2.msra.mxu0 0.0
      %273 = vmatprep.subr.mxu0 0.0
      %274 = vmatpush2.msra.mxu0 0.0
      %275 = vmatprep.subr.mxu0 0.0
      %276 = vmatpush2.msra.mxu0 0.0
      %277 = vmatprep.subr.mxu0 0.0
      %278 = vmatpush2.msra.mxu0 0.0
      %279 = vmatprep.subr.mxu0 0.0
      %280 = vmatpush2.msra.mxu0 0.0
      %281 = vmatprep.subr.mxu0 0.0
      %282 = vmatpush2.msra.mxu0 0.0
      %283 = vmatprep.subr.mxu0 0.0
      %284 = vmatpush2.msra.mxu0 0.0
      %285 = vmatprep.subr.mxu0 0.0
      %286 = vmatpush2.msra.mxu0 0.0
      %287 = vmatprep.subr.mxu0 0.0
      %288 = vmatpush2.msra.mxu0 0.0
      %289 = vmatprep.subr.mxu0 0.0
      %290 = vmatpush2.msra.mxu0 0.0
      %291 = vmatprep.subr.mxu0 0.0
      %292 = vmatpush2.msra.mxu0 0.0
      %293 = vmatprep.subr.mxu0 0.0
      %294 = vmatpush2.msra.mxu0 0.0
      %295 = vmatprep.subr.mxu0 0.0
      %296 = vmatpush2.msra.mxu0 0.0
      %297 = vmatprep.mubr.f32.mxu0 0.0
      %298 = vmatmul.mubr.f32.gmra.mxu0 %v227
      %v299 = vpop.f32.mrf.mxu0
      %v300 = vadd.f32 0.0, %v299
      %v301 = vpop.f32.mrf.mxu0
      %302 = vdwg.mxu0
      %v303 = vsub.f32 %v213, %v300
      %v304 = vmul.f32 %v303, %v303
      %vm305 = vcmask 64512
      %v306 = vsel %vm305, %v304, 0.0
      %307 = vadd.xlane.f32.xlu0 %v306
      %v308 = vpop.xlane.xlu0 %307
      %v309 = vmax.f32 %v308, 1e-12
      %v310 = vmin.f32 %v309, 1e+12
      %s311 = sadd.s32 %s18, %s19
      %s312 = smul.u32 %s311, 8
      %v313 = vlaneseq
      %v314 = vshrl.u32 %v313, 7
      %v315 = vstv %s312
      %v316 = vadd.s32 %v315, %v314
      %vm317 = vcmp.lt.s32.totalorder %v316, 16
      %v318 = vsel %vm317, %v310, 0.0
      %v319 = vld [vmem:[%s206] sm:$0x1]
      %v320 = vrot.slane %v318, 4
      %v321 = vadd.f32 %v318, %v320
      %v322 = vrot.slane %v321, 2
      %v323 = vadd.f32 %v321, %v322
      %v324 = vrot.slane %v323, 1
      %v325 = vadd.f32 %v323, %v324
      %v326 = vadd.f32 %v319, %v325
      %vm327 = vcmask 0
      %328 = vst.msk [vmem:[%s206] sm:$0x1] %vm327, %v326
      %p329 = scmp.lt.s32.totalorder %s18, 1
      %s330 = scalar_select %p329, %s18, 1
      %s331 = scalar_lea.vmem %s3, %s330
      // Predicated region
      $region37: #{tpu_custom_call.1} parent=31 // pred_check
        %p332 = pneg %p121
      $region38: #{tpu_custom_call.1} parent=31 // pred_check_branch
        %334 = sbr.rel (%p332) target = $region40
      $region39: #{tpu_custom_call.1} parent=31 // pred_region
        _
      $region40: #{tpu_custom_call.1} parent=31 // pred_fallthru
        _
    $region32: #{tpu_custom_call.1} parent=5 // pred_fallthru
      _
    %p335 = scmp.le.s32.totalorder 2, %s9
    // Predicated region
    $region41: #{tpu_custom_call.1} parent=5 // pred_check
      %p336 = pneg %p335
    $region42: #{tpu_custom_call.1} parent=5 // pred_check_branch
      %338 = sbr.rel (%p336) target = $region44
    $region43: #{tpu_custom_call.1} parent=5 // pred_region
      %s339 = ssub.s32 %s9, 2
      // Predicated region
      $region45: #{tpu_custom_call.1} parent=43 // pred_check
        %p340 = pneg %p127
      $region46: #{tpu_custom_call.1} parent=43 // pred_check_branch
        %342 = sbr.rel (%p340) target = $region48
      $region47: #{tpu_custom_call.1} parent=43 // pred_region
        %p343 = scmp.lt.s32.totalorder %s20, 1
        %s344 = scalar_select %p343, %s20, 1
        %s345 = scalar_lea.vmem %s3, %s344
      $region48: #{tpu_custom_call.1} parent=43 // pred_fallthru
        _
    $region44: #{tpu_custom_call.1} parent=5 // pred_fallthru
      _
  $region6: #{tpu_custom_call.1} parent=0 // loop_footer
    %s13 = sadd.s32 1, %s9
  $region7: #{tpu_custom_call.1} parent=0 // loop_footer_branch
    %8 = sbr.rel target = $region3
  $region8: #{tpu_custom_call.1} parent=0 // loop_exit
    _

</llo_original>
